<compile_context>
chip_gen: v6e
topology: v6e:2x2x1
jax: 0.10.0
libtpu: 0.0.40
codegen_flags: <defaults>
</compile_context>

<pallas_src>
import jax
import jax.numpy as jnp
from jax.experimental import pallas as pl
from jax.experimental.pallas import tpu as pltpu


def _make_fused_adapt_kernel(ncat):
    """Kernel over one row tile: out_c = x_c @ A_c for every category c."""

    def kernel(*refs):
        a_refs = refs[:ncat]
        x_refs = refs[ncat:2 * ncat]
        o_refs = refs[2 * ncat:]
        for a_ref, x_ref, o_ref in zip(a_refs, x_refs, o_refs):
            o_ref[...] = jnp.dot(
                x_ref[...], a_ref[...],
                preferred_element_type=jnp.float32,
            ).astype(o_ref.dtype)

    return kernel


def _round_up(x, m):
    return ((x + m - 1) // m) * m


def _largest_pow2_divisor(n, cap):
    """Largest power of two <= cap that divides n (cap is a power of two)."""
    k = 1
    while k * 2 <= cap and n % (k * 2) == 0:
        k *= 2
    return k


def _chip_info():
    """Return (tensorcores per device, physical VMEM bytes per TensorCore)."""
    kind = ""
    try:
        kind = jax.devices()[0].device_kind.lower()
    except Exception:
        pass
    if "7" in kind:                       # v7x-class: 2 TCs/chip, 64 MiB VMEM/TC
        return 2, 64 * 1024 * 1024
    return 1, 128 * 1024 * 1024           # v5e / v6e: 1 TC/chip, 128 MiB VMEM


def _adapt_group(sfms, params, *, tm_target=8192):
    """Fused adaptation of several categories sharing (batch, length)."""
    batch, length = sfms[0].shape[:2]
    M = batch * length
    num_cores, vmem_phys = _chip_info()

    xs, a_mats, packs, widths, dtypes = [], [], [], [], []
    for sfm, p in zip(sfms, params):
        nf = p.shape[0]
        assert sfm.shape == (batch, length, nf)
        assert p.shape == (nf, nf)
        # Hoisted column-wise softmax: log_softmax(dim=0).exp() == softmax(axis=0).
        align = jax.nn.softmax(p.astype(jnp.float32), axis=0)
        x = sfm.reshape(M, nf)
        k_max = 128 // nf if (nf <= 128 and 128 % nf == 0) else 1
        # Largest power-of-two packing factor dividing M: keeps the output
        # lane-dense (width = k*nf divides 128) even when M % (128//nf) != 0.
        k = _largest_pow2_divisor(M, k_max) if k_max > 1 else 1
        if k > 1:
            # Free, row-major reshape to a lane-dense layout; RHS becomes a
            # k-way block-diagonal copy of the alignment matrix.
            x = x.reshape(M // k, k * nf)
            a = jnp.kron(jnp.eye(k, dtype=align.dtype), align)
        else:
            a = align
        xs.append(x)
        # NOTE: for bf16 inputs the alignment is cast to bf16 (tiny drift vs
        # an fp32-alignment reference); fp32 inputs keep fp32 alignment.
        a_mats.append(a.astype(sfm.dtype))
        packs.append(k)
        widths.append(k * nf)
        dtypes.append(sfm.dtype)

    # ---- Row-tile selection -------------------------------------------------
    # Dtype-aware sublane alignment: the packed block row count tm//k must be
    # a multiple of the native sublane tile (16 for 2-byte, 8 for 4-byte
    # dtypes) for every category.  All k are powers of two, so max() works.
    row_align = 1
    for k, dt in zip(packs, dtypes):
        sub = 16 if jnp.dtype(dt).itemsize == 2 else 8
        row_align = max(row_align, sub * k)

    # HBM/VMEM bytes moved per original row: in + out, double-buffered.
    bytes_per_row = sum(2 * 2 * p.shape[0] * jnp.dtype(dt).itemsize
                        for p, dt in zip(params, dtypes))
    # Packed alignment matrices are constant-index but still double-buffered;
    # charge them against the budget so the tile cap stays honest.
    a_bytes = sum(2 * a.size * jnp.dtype(a.dtype).itemsize for a in a_mats)

    vmem_budget = min(24 * 1024 * 1024, vmem_phys // 3)
    budget = max(4 * 1024 * 1024, vmem_budget - a_bytes)
    cap = max(row_align, (budget // max(bytes_per_row, 1)) // row_align * row_align)
    tm = max(row_align, min(tm_target, cap) // row_align * row_align)

    # Generation-aware grid sizing.
    min_blocks = 2 * num_cores if num_cores > 1 else 1
    if M > tm:
        # Grid comes naturally from the tile size; on multi-TC chips make sure
        # each core still gets >= 2 steps so DMA/compute overlap inside a core.
        if num_cores > 1 and pl.cdiv(M, tm) < min_blocks and M >= min_blocks * row_align:
            tm = _round_up(pl.cdiv(M, min_blocks), row_align)
    else:
        if num_cores > 1 and M >= min_blocks * row_align:
            tm = _round_up(pl.cdiv(M, min_blocks), row_align)
        else:
            # Single-TC (v5e/v6e) small M: one full-array block — a forced
            # split only adds per-step overhead with no overlap to win.
            tm = M
    grid = pl.cdiv(M, tm)

    # ---- VMEM limit & cost estimate ------------------------------------------
    needed = a_bytes
    for k, w, dt in zip(packs, widths, dtypes):
        needed += 2 * 2 * (tm // k) * w * jnp.dtype(dt).itemsize
    vmem_limit = int(min(vmem_phys, max(needed + (8 << 20), 32 << 20)))

    flops = 0
    bytes_accessed = 0
    for x, a, dt in zip(xs, a_mats, dtypes):
        m_p, w = x.shape
        flops += 2 * m_p * w * w
        bytes_accessed += 2 * x.size * jnp.dtype(dt).itemsize
        bytes_accessed += a.size * jnp.dtype(a.dtype).itemsize
    cost = pl.CostEstimate(flops=flops, transcendentals=0,
                           bytes_accessed=bytes_accessed)

    # ---- Specs ----------------------------------------------------------------
    a_specs = [pl.BlockSpec(a.shape, lambda i: (0, 0)) for a in a_mats]
    x_specs = [pl.BlockSpec((tm // k, w), lambda i: (i, 0))
               for k, w in zip(packs, widths)]
    out_specs = tuple(pl.BlockSpec((tm // k, w), lambda i: (i, 0))
                      for k, w in zip(packs, widths))
    out_shapes = tuple(jax.ShapeDtypeStruct(x.shape, dt)
                       for x, dt in zip(xs, dtypes))

    outs = pl.pallas_call(
        _make_fused_adapt_kernel(len(xs)),
        out_shape=out_shapes,
        grid_spec=pltpu.PrefetchScalarGridSpec(
            num_scalar_prefetch=0,
            grid=(grid,),
            in_specs=a_specs + x_specs,
            out_specs=out_specs,
        ),
        compiler_params=pltpu.CompilerParams(
            dimension_semantics=("parallel",),
            vmem_limit_bytes=vmem_limit),
        cost_estimate=cost,
    )(*a_mats, *xs)
    if not isinstance(outs, (list, tuple)):
        outs = (outs,)

    # Free reshapes back to (batch, length, nf) per category.
    return [o.reshape(batch, length, p.shape[0]) for o, p in zip(outs, params)]


def adapt_layer_forward(dense_feat_matrices, adapters, *, tm_target=8192):
    """Mirror of AdaptLayer.forward: only categories with adapters are emitted.

    Categories sharing the same (batch, length) are fused into a single
    pallas_call to amortize launch/pipeline overhead.
    """
    # TODO(synk): PyTorch's refine_names(...) is metadata-only; no Pallas analogue.
    groups = {}
    order = []
    for cat, sfm in dense_feat_matrices.items():
        if cat in adapters:
            key = sfm.shape[:2]
            if key not in groups:
                groups[key] = []
                order.append(key)
            groups[key].append(cat)

    ret = {}
    for key in order:
        cats = groups[key]
        outs = _adapt_group([dense_feat_matrices[c] for c in cats],
                            [adapters[c] for c in cats],
                            tm_target=tm_target)
        for c, o in zip(cats, outs):
            ret[c] = o
    return ret


def _reference(dense_feat_matrices, adapters):
    ret = {}
    for cat, sfm in dense_feat_matrices.items():
        if cat in adapters:
            align = jax.nn.softmax(adapters[cat], axis=0)
            ret[cat] = jnp.einsum("blf,fg->blg", sfm, align)
    return ret


if __name__ == "__main__":
    key = jax.random.PRNGKey(0)

    # Synthetic "categories" with (nf, nf) adapter params (PyTorch init is
    # zeros; use small random values so the softmax is non-trivial).
    cat_nf = {"ptype": 32, "c_voicing": 16}

    batch, length = 2, 8
    adapters = {}
    feats = {}
    for cat, nf in cat_nf.items():
        key, k1, k2 = jax.random.split(key, 3)
        adapters[cat] = 0.1 * jax.random.normal(k1, (nf, nf), dtype=jnp.float32)
        feats[cat] = jax.random.normal(k2, (batch, length, nf), dtype=jnp.float32)

    out = adapt_layer_forward(feats, adapters)
    jax.block_until_ready(out)

    ref = _reference(feats, adapters)
    for cat in feats:
        assert out[cat].shape == (batch, length, cat_nf[cat])
        assert jnp.allclose(out[cat], ref[cat], atol=1e-5, rtol=1e-5), cat

    print("KERNEL_OK")
</pallas_src>

<mosaic_0001>
module attributes {stable_mosaic.version = 11 : i64} {
  func.func @kernel(%arg0: i32, %arg1: memref<128x128xf32, #tpu.memory_space<vmem>>, %arg2: memref<128x128xf32, #tpu.memory_space<vmem>>, %arg3: memref<4x128xf32, #tpu.memory_space<vmem>>, %arg4: memref<2x128xf32, #tpu.memory_space<vmem>>, %arg5: memref<4x128xf32, #tpu.memory_space<vmem>>, %arg6: memref<2x128xf32, #tpu.memory_space<vmem>>) attributes {dimension_semantics = [#tpu.dimension_semantics<parallel>], iteration_bounds = array<i64: 1>, scalar_prefetch = 0 : i64, scratch_operands = 0 : i64, tpu.core_type = #tpu.core_type<tc>, window_params = [{pipeline_mode = #tpu.pipeline_mode<synchronous>, transform_indices = @transform_0, window_bounds = array<i64: 128, 128>}, {pipeline_mode = #tpu.pipeline_mode<synchronous>, transform_indices = @transform_1, window_bounds = array<i64: 128, 128>}, {transform_indices = @transform_2, window_bounds = array<i64: 4, 128>}, {transform_indices = @transform_3, window_bounds = array<i64: 2, 128>}, {transform_indices = @transform_4, window_bounds = array<i64: 4, 128>}, {transform_indices = @transform_5, window_bounds = array<i64: 2, 128>}]} {
    %c0 = arith.constant 0 : index
    %c0_0 = arith.constant 0 : index
    %0 = vector.load %arg3[%c0, %c0_0] : memref<4x128xf32, #tpu.memory_space<vmem>>, vector<4x128xf32>
    %c0_1 = arith.constant 0 : index
    %c0_2 = arith.constant 0 : index
    %1 = vector.load %arg1[%c0_1, %c0_2] : memref<128x128xf32, #tpu.memory_space<vmem>>, vector<128x128xf32>
    %cst = arith.constant dense<0.000000e+00> : vector<4x128xf32>
    %2 = tpu.matmul %0, %1, %cst {dimension_numbers = #tpu.dot_dimension_numbers<[1], [0], [0], [1], [0, 0, 1, 1], [], []>} : vector<4x128xf32>, vector<128x128xf32>, vector<4x128xf32> -> vector<4x128xf32>
    %c0_3 = arith.constant 0 : index
    %c0_4 = arith.constant 0 : index
    %3 = vector.load %arg5[%c0_3, %c0_4] : memref<4x128xf32, #tpu.memory_space<vmem>>, vector<4x128xf32>
    tpu.vector_store %arg5[%c0_3, %c0_4], %2 {strides = array<i32>} : memref<4x128xf32, #tpu.memory_space<vmem>>, vector<4x128xf32>,
    %c0_5 = arith.constant 0 : index
    %c0_6 = arith.constant 0 : index
    %4 = vector.load %arg4[%c0_5, %c0_6] : memref<2x128xf32, #tpu.memory_space<vmem>>, vector<2x128xf32>
    %c0_7 = arith.constant 0 : index
    %c0_8 = arith.constant 0 : index
    %5 = vector.load %arg2[%c0_7, %c0_8] : memref<128x128xf32, #tpu.memory_space<vmem>>, vector<128x128xf32>
    %cst_9 = arith.constant dense<0.000000e+00> : vector<2x128xf32>
    %6 = tpu.matmul %4, %5, %cst_9 {dimension_numbers = #tpu.dot_dimension_numbers<[1], [0], [0], [1], [0, 0, 1, 1], [], []>} : vector<2x128xf32>, vector<128x128xf32>, vector<2x128xf32> -> vector<2x128xf32>
    %c0_10 = arith.constant 0 : index
    %c0_11 = arith.constant 0 : index
    %7 = vector.load %arg6[%c0_10, %c0_11] : memref<2x128xf32, #tpu.memory_space<vmem>>, vector<2x128xf32>
    tpu.vector_store %arg6[%c0_10, %c0_11], %6 {strides = array<i32>} : memref<2x128xf32, #tpu.memory_space<vmem>>, vector<2x128xf32>,
    return
  }
  func.func @transform_0(%arg0: i32) -> (i32, i32) {
    %c0_i32 = arith.constant 0 : i32
    %c0_i32_0 = arith.constant 0 : i32
    %c0_i32_1 = arith.constant 0 : i32
    return %c0_i32, %c0_i32_0 : i32, i32
  }
  func.func @transform_1(%arg0: i32) -> (i32, i32) {
    %c0_i32 = arith.constant 0 : i32
    %c0_i32_0 = arith.constant 0 : i32
    %c0_i32_1 = arith.constant 0 : i32
    return %c0_i32, %c0_i32_0 : i32, i32
  }
  func.func @transform_2(%arg0: i32) -> (i32, i32) {
    %c0_i32 = arith.constant 0 : i32
    %c0_i32_0 = arith.constant 0 : i32
    return %arg0, %c0_i32 : i32, i32
  }
  func.func @transform_3(%arg0: i32) -> (i32, i32) {
    %c0_i32 = arith.constant 0 : i32
    %c0_i32_0 = arith.constant 0 : i32
    return %arg0, %c0_i32 : i32, i32
  }
  func.func @transform_4(%arg0: i32) -> (i32, i32) {
    %c0_i32 = arith.constant 0 : i32
    %c0_i32_0 = arith.constant 0 : i32
    return %arg0, %c0_i32 : i32, i32
  }
  func.func @transform_5(%arg0: i32) -> (i32, i32) {
    %c0_i32 = arith.constant 0 : i32
    %c0_i32_0 = arith.constant 0 : i32
    return %arg0, %c0_i32 : i32, i32
  }
}

</mosaic_0001>

<llo_original>
// kernel: tpu_custom_call.1
$region0: #{tpu_custom_call.1}
  #allocation0 [shape = 'u32[]', space=smem, size = 0x4, offset = 0x4, fixed_abs, tag = 'smem constant byte address 0x4 - core index']
  #allocation1 [shape = 'u32[144,128]{1,0:T(1,128)}', space=vmem, size = 0x12000, scoped, tag = 'internal scratch']
  %s0 = inlined_call_operand.hbm [shape: f32[128,128], index: 0, kind: input, shape index: {}]
  %s1 = inlined_call_operand.hbm [shape: f32[128,128], index: 1, kind: input, shape index: {}]
  %s2 = inlined_call_operand.hbm [shape: f32[4,128], index: 2, kind: input, shape index: {}]
  %s3 = inlined_call_operand.vmem [shape: f32[2,128], index: 3, kind: input, shape index: {}]
  %s4 = inlined_call_operand.hbm [shape: f32[4,128], index: 4, kind: output, shape index: {0}]
  %s5 = inlined_call_operand.hbm [shape: f32[2,128], index: 5, kind: output, shape index: {1}]
  %6 = xla_tuple %s4, %s5
  %s7 = sld [smem:[#allocation0]]
  $region46: #{tpu_custom_call.1} parent=0
    _
  %s9 = ssub.s32 1, %s7
  %s10 = scalar_select 0, %s9, %s7
  $region1: #{tpu_custom_call.1} parent=0
    #allocation2 [shape = 'u8[65536]{0}', space=vmem, size = 0x10000, scoped, tag = 'input window, operand 0, single buffered']
    #allocation3 [shape = 's32[1]{0}', space=sflag, size = 0x4, scoped, tag = 'scoped memory for tpu_custom_call.1']
    #allocation4 [shape = 's32[1]{0}', space=sflag, size = 0x4, scoped, tag = 'scoped memory for tpu_custom_call.1']
    #allocation5 [shape = 'u8[65536]{0}', space=vmem, size = 0x10000, scoped, tag = 'input window, operand 1, single buffered']
    #allocation6 [shape = 's32[1]{0}', space=sflag, size = 0x4, scoped, tag = 'scoped memory for tpu_custom_call.1']
    #allocation7 [shape = 'u8[2048]{0}', space=vmem, size = 0x800, scoped, tag = 'input window, operand 2, single buffered']
    #allocation8 [shape = 'u8[2048]{0}', space=vmem, size = 0x800, scoped, tag = 'output window, operand 0, single buffered']
    #allocation9 [shape = 'u8[1024]{0}', space=vmem, size = 0x400, scoped, tag = 'output window, operand 1, single buffered']
    #allocation10 [shape = 's32[1]{0}', space=sflag, size = 0x4, scoped, tag = 'scoped memory for tpu_custom_call.1']
    %11 = vsyncpa [#allocation3], 0
    %12 = vsyncpa [#allocation6], 0
    %13 = vsyncpa [#allocation4], 0
    %14 = vsyncpa [#allocation10], 0
    // Predicated region
    $region2: #{tpu_custom_call.1} parent=1 // pred_check
      _
    $region3: #{tpu_custom_call.1} parent=1 // pred_check_branch
      %16 = sbr.rel (0) target = $region5
    $region4: #{tpu_custom_call.1} parent=1 // pred_region
      %s18 = ssub.s32 2048, 2048
      %19 = vsyncadd [#allocation3], %s18
      %s20 = sshll.u32 [#allocation2], 4
      %s21 = int_to_ptr.vmem [resolvable:$true] %s20
      %26 = dma.hbm_to_vmem [thread:$0]  %s0, 2048, %s21, [#allocation3], 128, 128, 8
    $region5: #{tpu_custom_call.1} parent=1 // pred_fallthru
      _
    // Predicated region
    $region6: #{tpu_custom_call.1} parent=1 // pred_check
      _
    $region7: #{tpu_custom_call.1} parent=1 // pred_check_branch
      %28 = sbr.rel (0) target = $region9
    $region8: #{tpu_custom_call.1} parent=1 // pred_region
      %s30 = ssub.s32 2048, 2048
      %31 = vsyncadd [#allocation6], %s30
      %s32 = sshll.u32 [#allocation5], 4
      %s33 = int_to_ptr.vmem [resolvable:$true] %s32
      %38 = dma.hbm_to_vmem [thread:$0]  %s1, 2048, %s33, [#allocation6], 128, 128, 8
    $region9: #{tpu_custom_call.1} parent=1 // pred_fallthru
      _
    // Predicated region
    $region10: #{tpu_custom_call.1} parent=1 // pred_check
      _
    $region11: #{tpu_custom_call.1} parent=1 // pred_check_branch
      %40 = sbr.rel (0) target = $region13
    $region12: #{tpu_custom_call.1} parent=1 // pred_region
      %s42 = ssub.s32 64, 64
      %43 = vsyncadd [#allocation6], %s42
      %s45 = sshll.u32 [#allocation7], 4
      %s46 = int_to_ptr.vmem [resolvable:$true] %s45
      %48 = dma.hbm_to_vmem [thread:$0]  %s2, 64, %s46, [#allocation6]
    $region13: #{tpu_custom_call.1} parent=1 // pred_fallthru
      _
    // Predicated region
    $region14: #{tpu_custom_call.1} parent=1 // pred_check
      _
    $region15: #{tpu_custom_call.1} parent=1 // pred_check_branch
      %50 = sbr.rel (0) target = $region17
    $region16: #{tpu_custom_call.1} parent=1 // pred_region
      _
    $region17: #{tpu_custom_call.1} parent=1 // pred_fallthru
      _
    // Predicated region
    $region18: #{tpu_custom_call.1} parent=1 // pred_check
      _
    $region19: #{tpu_custom_call.1} parent=1 // pred_check_branch
      %52 = sbr.rel (0) target = $region21
    $region20: #{tpu_custom_call.1} parent=1 // pred_region
      %53 = dma.done [#allocation3], 2048
    $region21: #{tpu_custom_call.1} parent=1 // pred_fallthru
      _
    // Predicated region
    $region22: #{tpu_custom_call.1} parent=1 // pred_check
      _
    $region23: #{tpu_custom_call.1} parent=1 // pred_check_branch
      %55 = sbr.rel (0) target = $region25
    $region24: #{tpu_custom_call.1} parent=1 // pred_region
      %56 = dma.done [#allocation6], 2048
    $region25: #{tpu_custom_call.1} parent=1 // pred_fallthru
      _
    // Predicated region
    $region26: #{tpu_custom_call.1} parent=1 // pred_check
      _
    $region27: #{tpu_custom_call.1} parent=1 // pred_check_branch
      %58 = sbr.rel (0) target = $region29
    $region28: #{tpu_custom_call.1} parent=1 // pred_region
      %59 = dma.done [#allocation6], 64
    $region29: #{tpu_custom_call.1} parent=1 // pred_fallthru
      _
    %v60 = vld [vmem:[#allocation7] sm:$0xf]
    %v61 = vld [vmem:[#allocation2] sm:$0xff]
    %v62 = vld [vmem:[#allocation2 + $0x8] sm:$0xff]
    %v63 = vld [vmem:[#allocation2 + $0x10] sm:$0xff]
    %v64 = vld [vmem:[#allocation2 + $0x18] sm:$0xff]
    %v65 = vld [vmem:[#allocation2 + $0x20] sm:$0xff]
    %v66 = vld [vmem:[#allocation2 + $0x28] sm:$0xff]
    %v67 = vld [vmem:[#allocation2 + $0x30] sm:$0xff]
    %v68 = vld [vmem:[#allocation2 + $0x38] sm:$0xff]
    %v69 = vld [vmem:[#allocation2 + $0x40] sm:$0xff]
    %v70 = vld [vmem:[#allocation2 + $0x48] sm:$0xff]
    %v71 = vld [vmem:[#allocation2 + $0x50] sm:$0xff]
    %v72 = vld [vmem:[#allocation2 + $0x58] sm:$0xff]
    %v73 = vld [vmem:[#allocation2 + $0x60] sm:$0xff]
    %v74 = vld [vmem:[#allocation2 + $0x68] sm:$0xff]
    %v75 = vld [vmem:[#allocation2 + $0x70] sm:$0xff]
    %v76 = vld [vmem:[#allocation2 + $0x78] sm:$0xff]
    %77 = vmatprep.subr.mxu0 0.0
    %78 = vmatpush1.msra.mxu0 %v76
    %79 = vmatprep.subr.mxu0 0.0
    %80 = vmatpush1.msra.mxu0 %v75
    %81 = vmatprep.subr.mxu0 0.0
    %82 = vmatpush1.msra.mxu0 %v74
    %83 = vmatprep.subr.mxu0 0.0
    %84 = vmatpush1.msra.mxu0 %v73
    %85 = vmatprep.subr.mxu0 0.0
    %86 = vmatpush1.msra.mxu0 %v72
    %87 = vmatprep.subr.mxu0 0.0
    %88 = vmatpush1.msra.mxu0 %v71
    %89 = vmatprep.subr.mxu0 0.0
    %90 = vmatpush1.msra.mxu0 %v70
    %91 = vmatprep.subr.mxu0 0.0
    %92 = vmatpush1.msra.mxu0 %v69
    %93 = vmatprep.subr.mxu0 0.0
    %94 = vmatpush1.msra.mxu0 %v68
    %95 = vmatprep.subr.mxu0 0.0
    %96 = vmatpush1.msra.mxu0 %v67
    %97 = vmatprep.subr.mxu0 0.0
    %98 = vmatpush1.msra.mxu0 %v66
    %99 = vmatprep.subr.mxu0 0.0
    %100 = vmatpush1.msra.mxu0 %v65
    %101 = vmatprep.subr.mxu0 0.0
    %102 = vmatpush1.msra.mxu0 %v64
    %103 = vmatprep.subr.mxu0 0.0
    %104 = vmatpush1.msra.mxu0 %v63
    %105 = vmatprep.subr.mxu0 0.0
    %106 = vmatpush1.msra.mxu0 %v62
    %107 = vmatprep.subr.mxu0 0.0
    %108 = vmatpush1.msra.mxu0 %v61
    %109 = vmatprep.subr.mxu0 0.0
    %110 = vmatpush2.msra.mxu0 0.0
    %111 = vmatprep.subr.mxu0 0.0
    %112 = vmatpush2.msra.mxu0 0.0
    %113 = vmatprep.subr.mxu0 0.0
    %114 = vmatpush2.msra.mxu0 0.0
    %115 = vmatprep.subr.mxu0 0.0
    %116 = vmatpush2.msra.mxu0 0.0
    %117 = vmatprep.subr.mxu0 0.0
    %118 = vmatpush2.msra.mxu0 0.0
    %119 = vmatprep.subr.mxu0 0.0
    %120 = vmatpush2.msra.mxu0 0.0
    %121 = vmatprep.subr.mxu0 0.0
    %122 = vmatpush2.msra.mxu0 0.0
    %123 = vmatprep.subr.mxu0 0.0
    %124 = vmatpush2.msra.mxu0 0.0
    %125 = vmatprep.subr.mxu0 0.0
    %126 = vmatpush2.msra.mxu0 0.0
    %127 = vmatprep.subr.mxu0 0.0
    %128 = vmatpush2.msra.mxu0 0.0
    %129 = vmatprep.subr.mxu0 0.0
    %130 = vmatpush2.msra.mxu0 0.0
    %131 = vmatprep.subr.mxu0 0.0
    %132 = vmatpush2.msra.mxu0 0.0
    %133 = vmatprep.subr.mxu0 0.0
    %134 = vmatpush2.msra.mxu0 0.0
    %135 = vmatprep.subr.mxu0 0.0
    %136 = vmatpush2.msra.mxu0 0.0
    %137 = vmatprep.subr.mxu0 0.0
    %138 = vmatpush2.msra.mxu0 0.0
    %139 = vmatprep.subr.mxu0 0.0
    %140 = vmatpush2.msra.mxu0 0.0
    %141 = vmatprep.mubr.f32.mxu0 0.0
    %142 = vmatmul.mubr.f32.gmra.mxu0 %v60
    %v143 = vpop.f32.mrf.mxu0
    %v144 = vadd.f32 0.0, %v143
    %v145 = vpop.f32.mrf.mxu0
    %146 = vdwg.mxu0
    %147 = vst [vmem:[#allocation8] sm:$0xf] %v144
    %v148 = vld [vmem:[%s3] sm:$0x3]
    %v149 = vld [vmem:[#allocation5] sm:$0xff]
    %v150 = vld [vmem:[#allocation5 + $0x8] sm:$0xff]
    %v151 = vld [vmem:[#allocation5 + $0x10] sm:$0xff]
    %v152 = vld [vmem:[#allocation5 + $0x18] sm:$0xff]
    %v153 = vld [vmem:[#allocation5 + $0x20] sm:$0xff]
    %v154 = vld [vmem:[#allocation5 + $0x28] sm:$0xff]
    %v155 = vld [vmem:[#allocation5 + $0x30] sm:$0xff]
    %v156 = vld [vmem:[#allocation5 + $0x38] sm:$0xff]
    %v157 = vld [vmem:[#allocation5 + $0x40] sm:$0xff]
    %v158 = vld [vmem:[#allocation5 + $0x48] sm:$0xff]
    %v159 = vld [vmem:[#allocation5 + $0x50] sm:$0xff]
    %v160 = vld [vmem:[#allocation5 + $0x58] sm:$0xff]
    %v161 = vld [vmem:[#allocation5 + $0x60] sm:$0xff]
    %v162 = vld [vmem:[#allocation5 + $0x68] sm:$0xff]
    %v163 = vld [vmem:[#allocation5 + $0x70] sm:$0xff]
    %v164 = vld [vmem:[#allocation5 + $0x78] sm:$0xff]
    %165 = vmatprep.subr.mxu0 0.0
    %166 = vmatpush1.msra.mxu0 %v164
    %167 = vmatprep.subr.mxu0 0.0
    %168 = vmatpush1.msra.mxu0 %v163
    %169 = vmatprep.subr.mxu0 0.0
    %170 = vmatpush1.msra.mxu0 %v162
    %171 = vmatprep.subr.mxu0 0.0
    %172 = vmatpush1.msra.mxu0 %v161
    %173 = vmatprep.subr.mxu0 0.0
    %174 = vmatpush1.msra.mxu0 %v160
    %175 = vmatprep.subr.mxu0 0.0
    %176 = vmatpush1.msra.mxu0 %v159
    %177 = vmatprep.subr.mxu0 0.0
    %178 = vmatpush1.msra.mxu0 %v158
    %179 = vmatprep.subr.mxu0 0.0
    %180 = vmatpush1.msra.mxu0 %v157
    %181 = vmatprep.subr.mxu0 0.0
    %182 = vmatpush1.msra.mxu0 %v156
    %183 = vmatprep.subr.mxu0 0.0
    %184 = vmatpush1.msra.mxu0 %v155
    %185 = vmatprep.subr.mxu0 0.0
    %186 = vmatpush1.msra.mxu0 %v154
    %187 = vmatprep.subr.mxu0 0.0
    %188 = vmatpush1.msra.mxu0 %v153
    %189 = vmatprep.subr.mxu0 0.0
    %190 = vmatpush1.msra.mxu0 %v152
    %191 = vmatprep.subr.mxu0 0.0
    %192 = vmatpush1.msra.mxu0 %v151
    %193 = vmatprep.subr.mxu0 0.0
    %194 = vmatpush1.msra.mxu0 %v150
    %195 = vmatprep.subr.mxu0 0.0
    %196 = vmatpush1.msra.mxu0 %v149
    %197 = vmatprep.subr.mxu0 0.0
    %198 = vmatpush2.msra.mxu0 0.0
    %199 = vmatprep.subr.mxu0 0.0
    %200 = vmatpush2.msra.mxu0 0.0
    %201 = vmatprep.subr.mxu0 0.0
    %202 = vmatpush2.msra.mxu0 0.0
    %203 = vmatprep.subr.mxu0 0.0
    %204 = vmatpush2.msra.mxu0 0.0
    %205 = vmatprep.subr.mxu0 0.0
    %206 = vmatpush2.msra.mxu0 0.0
    %207 = vmatprep.subr.mxu0 0.0
    %208 = vmatpush2.msra.mxu0 0.0
    %209 = vmatprep.subr.mxu0 0.0
    %210 = vmatpush2.msra.mxu0 0.0
    %211 = vmatprep.subr.mxu0 0.0
    %212 = vmatpush2.msra.mxu0 0.0
    %213 = vmatprep.subr.mxu0 0.0
    %214 = vmatpush2.msra.mxu0 0.0
    %215 = vmatprep.subr.mxu0 0.0
    %216 = vmatpush2.msra.mxu0 0.0
    %217 = vmatprep.subr.mxu0 0.0
    %218 = vmatpush2.msra.mxu0 0.0
    %219 = vmatprep.subr.mxu0 0.0
    %220 = vmatpush2.msra.mxu0 0.0
    %221 = vmatprep.subr.mxu0 0.0
    %222 = vmatpush2.msra.mxu0 0.0
    %223 = vmatprep.subr.mxu0 0.0
    %224 = vmatpush2.msra.mxu0 0.0
    %225 = vmatprep.subr.mxu0 0.0
    %226 = vmatpush2.msra.mxu0 0.0
    %227 = vmatprep.subr.mxu0 0.0
    %228 = vmatpush2.msra.mxu0 0.0
    %229 = vmatprep.mubr.f32.mxu0 0.0
    %230 = vmatmul.mubr.f32.gmra.mxu0 %v148
    %v231 = vpop.f32.mrf.mxu0
    %v232 = vadd.f32 0.0, %v231
    %v233 = vpop.f32.mrf.mxu0
    %234 = vdwg.mxu0
    %235 = vst [vmem:[#allocation9] sm:$0x3] %v232
    // Predicated region
    $region30: #{tpu_custom_call.1} parent=1 // pred_check
      _
    $region31: #{tpu_custom_call.1} parent=1 // pred_check_branch
      %237 = sbr.rel (0) target = $region33
    $region32: #{tpu_custom_call.1} parent=1 // pred_region
      %s239 = ssub.s32 64, 64
      %240 = vsyncadd [#allocation4], %s239
      %s242 = sshll.u32 [#allocation8], 4
      %s243 = int_to_ptr.vmem [resolvable:$true] %s242
      %245 = dma.vmem_to_hbm [thread:$0]  %s243, 64, %s4, [#allocation4]
    $region33: #{tpu_custom_call.1} parent=1 // pred_fallthru
      _
    // Predicated region
    $region34: #{tpu_custom_call.1} parent=1 // pred_check
      _
    $region35: #{tpu_custom_call.1} parent=1 // pred_check_branch
      %247 = sbr.rel (0) target = $region37
    $region36: #{tpu_custom_call.1} parent=1 // pred_region
      %s249 = ssub.s32 32, 32
      %250 = vsyncadd [#allocation10], %s249
      %s252 = sshll.u32 [#allocation9], 4
      %s253 = int_to_ptr.vmem [resolvable:$true] %s252
      %255 = dma.vmem_to_hbm [thread:$0]  %s253, 32, %s5, [#allocation10]
    $region37: #{tpu_custom_call.1} parent=1 // pred_fallthru
      _
    // Predicated region
    $region38: #{tpu_custom_call.1} parent=1 // pred_check
      _
    $region39: #{tpu_custom_call.1} parent=1 // pred_check_branch
      %257 = sbr.rel (0) target = $region41
    $region40: #{tpu_custom_call.1} parent=1 // pred_region
      %258 = dma.done [#allocation4], 64
    $region41: #{tpu_custom_call.1} parent=1 // pred_fallthru
      _
    // Predicated region
    $region42: #{tpu_custom_call.1} parent=1 // pred_check
      _
    $region43: #{tpu_custom_call.1} parent=1 // pred_check_branch
      %260 = sbr.rel (0) target = $region45
    $region44: #{tpu_custom_call.1} parent=1 // pred_region
      %261 = dma.done [#allocation10], 32
    $region45: #{tpu_custom_call.1} parent=1 // pred_fallthru
      _
    %262 = vsyncpa [#allocation3], 1
    %263 = vsyncpa [#allocation6], 1
    %264 = vsyncpa [#allocation4], 1
    %265 = vsyncpa [#allocation10], 1

</llo_original>
